<compile_context>
chip_gen: v7x
topology: tpu7x:2x2x1
jax: 0.10.0
libtpu: 0.0.40
codegen_flags: <defaults>
</compile_context>

<pallas_src>
import math
import numpy as np
import jax
import jax.numpy as jnp
from jax import lax
from jax.experimental import pallas as pl
from jax.experimental.pallas import tpu as pltpu

LN_EPS = 1e-5  # PyTorch nn.LayerNorm default eps


def _round_up(x, m):
    return ((x + m - 1) // m) * m


def _cdiv(a, b):
    return -(-a // b)


def _device_kind():
    try:
        return jax.devices()[0].device_kind.lower()
    except Exception:
        return ""


def _chip_budget(kind):
    """(vmem_limit_bytes, is_dual_core, mxu_row_multiple) for the local chip."""
    if ("v7" in kind) or ("7x" in kind):
        # 64 MiB VMEM per TensorCore, 2 TensorCores -> leave compiler headroom.
        return 48 * 1024 * 1024, True, 256
    if ("v2" in kind) or ("v3" in kind):
        return 12 * 1024 * 1024, False, 128
    if ("v5e" in kind) or ("v5 lite" in kind) or ("v5lite" in kind):
        return 96 * 1024 * 1024, False, 128
    # v4 / v5p / v6e: 128 MiB physical VMEM, single-TensorCore grid semantics here.
    return 96 * 1024 * 1024, False, 256


def _choose_block_batch(N, n_pad, d, K, d_hat, x_bytes, vmem_limit, dual_core, row_mult):
    """Largest per-step batch block B that fits the VMEM budget, targeting
    ~1024-4096 MXU rows (B*n_pad) per step instead of tiny overhead-bound steps."""
    d_l, dh_l, k_l = _round_up(d, 128), _round_up(d_hat, 128), _round_up(K, 128)
    per_b = (2 * n_pad * d_l * x_bytes              # X block (double-buffered stream)
             + 2 * K * dh_l * 4                     # out block (double-buffered)
             + n_pad * dh_l * 4                     # k = X @ Wk (f32)
             + 3 * n_pad * k_l * 4                  # logits / attn / W (f32)
             + _round_up(K, 8) * (d_l + dh_l) * 4)  # t = W^T X and the S_hat tile
    # Resident weights (Wk, Wv, q^T) are double-buffered by default -> factor 2.
    resident = 2 * x_bytes * (2 * d * dh_l + _round_up(d_hat, 8) * k_l)
    budget = int(0.7 * vmem_limit) - resident - (2 << 20)
    b_vmem = max(1, budget // per_b)
    b_rows = max(1, 4096 // n_pad)                  # ~1k-4k MXU rows per grid step
    B = int(max(1, min(N, b_vmem, b_rows)))
    # Align B*n_pad to the MXU pass width when that costs nothing.
    step = row_mult // math.gcd(row_mult, n_pad)
    if B >= step:
        B = (B // step) * step
    if dual_core and N >= 2:
        # v7x only: keep >=2 (and even) grid steps so the "parallel" batch axis
        # load-balances across both TensorCores.
        B = min(B, (N + 1) // 2)
        G = _cdiv(N, B)
        if G > 1 and G % 2 == 1:
            B = max(1, _cdiv(N, G + 1))
    return B


def _make_kernel(B, n, K, d_hat, eps, rows_flat_out, mxu_dtype):
    """mxu_dtype=None -> pure f32; otherwise MXU operands are cast to mxu_dtype
    (e.g. bf16) with f32 accumulation; sigmoid/sum/normalize always stay f32."""

    def kernel(x_ref, qT_ref, wk_ref, wv_ref, out_ref):
        # x_ref : (B, n, d)    streamed batch block (f32 or bf16)
        # qT_ref: (d_hat, K)   (1/sqrt(d_hat)) * (LN(S) @ Wq)^T        (resident)
        # wk_ref: (d, d_hat)   resident
        # wv_ref: (d, d_hat)   resident
        xb = x_ref[...]                           # (B, n, d)
        xf = xb.reshape(B * n, xb.shape[-1])      # layout-free: n is sublane-aligned

        # ---- keys + slot logits: two large lane-dense MXU matmuls, f32 accumulation
        k = jnp.dot(xf, wk_ref[...], preferred_element_type=jnp.float32)   # (B*n, d_hat)
        kq = k if mxu_dtype is None else k.astype(mxu_dtype)
        m = jnp.dot(kq, qT_ref[...], preferred_element_type=jnp.float32)   # (B*n, K)

        # ---- attention weights in f32; exact slot-axis normalization
        attn = jax.nn.sigmoid(m) + eps
        w = attn / jnp.sum(attn, axis=-1, keepdims=True)                   # (B*n, K)

        # ---- re-associated epilogue: S_hat = (W^T X) @ Wv
        wb = w.reshape(B, n, K)                   # layout-free: n is sublane-aligned
        if mxu_dtype is not None:
            wb = wb.astype(mxu_dtype)
        t = lax.dot_general(wb, xb, (((1,), (1,)), ((0,), (0,))),
                            preferred_element_type=jnp.float32)            # (B, K, d)
        tf = t.reshape(B * K, t.shape[-1])
        if mxu_dtype is not None:
            tf = tf.astype(mxu_dtype)
        s_hat = jnp.dot(tf, wv_ref[...], preferred_element_type=jnp.float32)  # (B*K, d_hat)

        if rows_flat_out:
            out_ref[...] = s_hat.astype(out_ref.dtype)                     # (B*K, d_hat)
        else:
            out_ref[...] = s_hat.reshape(B, K, d_hat).astype(out_ref.dtype)

    return kernel


def slot_set_encoder_forward(X, S_param, Wk, Wq, Wv, gamma, beta, d_hat,
                             eps=1e-8, block_batch=None, compute_dtype=None):
    """Deterministic-slots SlotSetEncoder forward.

    X: (N, n, d); S_param: (1, K, h) (the nn.Parameter self.S); Wk/Wv: (d, d_hat);
    Wq: (h, d_hat); gamma/beta: (1, h).  Returns S_hat: (N, K, d_hat) float32.

    compute_dtype=jnp.bfloat16 casts the MXU operands (X, Wk, Wv, q) to bf16 in the
    wrapper (halving streamed-X DMA bytes); accumulation and all VPU/EUP math stay
    f32, so it is valid on v5e as well as v6e/v7x.
    """
    N, n, d = X.shape
    _, K, h = S_param.shape
    f32 = jnp.float32
    mxu_dtype = None if compute_dtype in (None, f32) else jnp.dtype(compute_dtype)
    x_dtype = f32 if mxu_dtype is None else mxu_dtype
    x_bytes = jnp.dtype(x_dtype).itemsize

    # ---- hoisted batch-invariant slot path (computed once, not per grid step):
    # LayerNorm(S), q = LN(S) @ Wq, with the 1/sqrt(d_hat) scale folded in and
    # pre-transposed so the in-kernel logits matmul needs no per-step transpose.
    mean = jnp.mean(S_param, axis=-1, keepdims=True)
    var = jnp.mean((S_param - mean) ** 2, axis=-1, keepdims=True)
    s_n = (S_param - mean) * lax.rsqrt(var + LN_EPS)
    s_n = s_n * gamma.reshape(1, 1, h) + beta.reshape(1, 1, h)             # (1, K, h)
    q = (1.0 / math.sqrt(d_hat)) * jnp.dot(s_n[0].astype(f32), Wk * 0 + Wq if False else Wq)
    qT = jnp.transpose(q).astype(x_dtype)                                  # (d_hat, K)

    # ---- pad the set dim so in-kernel reshapes are layout-free (exact: zero rows
    # contribute 0 to W^T X and do not perturb other rows' slot weights).
    sub = 8 * (4 // x_bytes)                     # 8 for f32, 16 for bf16
    n_pad = _round_up(n, sub)

    kind = _device_kind()
    vmem_limit, dual_core, row_mult = _chip_budget(kind)

    if block_batch is not None:
        B = int(max(1, min(N, block_batch)))
    else:
        B = _choose_block_batch(N, n_pad, d, K, d_hat, x_bytes, vmem_limit,
                                dual_core, row_mult)
    G = _cdiv(N, B)
    N_pad = G * B

    Xp = X
    if n_pad != n or N_pad != N:
        Xp = jnp.pad(X, ((0, N_pad - N), (0, n_pad - n), (0, 0)))
    Xp = Xp.astype(x_dtype)
    Wk_c = Wk.astype(x_dtype)
    Wv_c = Wv.astype(x_dtype)

    # Output layout: rows flattened to (N_pad*K, d_hat) -> exactly N*K*d_hat*4 bytes of
    # HBM writeback (no d_hat->128 padding, no in-kernel cross-lane relayout).  Falls
    # back to a (B, K, d_hat) block if B*K would break the sublane-alignment rule.
    rows_flat_out = (G == 1) or ((B * K) % 8 == 0)
    if rows_flat_out:
        out_shape = jax.ShapeDtypeStruct((N_pad * K, d_hat), f32)
        out_spec = pl.BlockSpec((B * K, d_hat), lambda i: (i, 0))
    else:
        out_shape = jax.ShapeDtypeStruct((N_pad, K, d_hat), f32)
        out_spec = pl.BlockSpec((B, K, d_hat), lambda i: (i, 0, 0))

    kernel = _make_kernel(B, n_pad, K, d_hat, eps, rows_flat_out, mxu_dtype)

    # NOTE: q^T / Wk / Wv use constant index maps (stay VMEM-resident, never re-DMA'd);
    # they are still double-buffered by default — that cost is charged to the VMEM
    # budget above rather than using pipeline_mode overrides, to keep lowering portable.
    grid_spec = pltpu.PrefetchScalarGridSpec(
        num_scalar_prefetch=0,
        grid=(G,),
        in_specs=[
            pl.BlockSpec((B, n_pad, d), lambda i: (i, 0, 0)),   # X (streamed)
            pl.BlockSpec((d_hat, K), lambda i: (0, 0)),         # q^T (resident)
            pl.BlockSpec((d, d_hat), lambda i: (0, 0)),         # Wk (resident)
            pl.BlockSpec((d, d_hat), lambda i: (0, 0)),         # Wv (resident)
        ],
        out_specs=out_spec,
    )

    out = pl.pallas_call(
        kernel,
        out_shape=out_shape,
        grid_spec=grid_spec,
        compiler_params=pltpu.CompilerParams(
            dimension_semantics=("parallel",),
            vmem_limit_bytes=int(vmem_limit),
        ),
    )(Xp, qT, Wk_c, Wv_c)

    if rows_flat_out:
        return out[: N * K].reshape(N, K, d_hat)
    return out[:N]


def reference_forward_np(X, S, Wk, Wq, Wv, gamma, beta, d_hat, eps=1e-8):
    """Pure-numpy float64 reference replicating the PyTorch forward (S: (N, K, h))."""
    X = np.asarray(X, np.float64)
    S = np.asarray(S, np.float64)
    Wk = np.asarray(Wk, np.float64)
    Wq = np.asarray(Wq, np.float64)
    Wv = np.asarray(Wv, np.float64)
    gamma = np.asarray(gamma, np.float64)
    beta = np.asarray(beta, np.float64)
    mean = S.mean(-1, keepdims=True)
    var = ((S - mean) ** 2).mean(-1, keepdims=True)
    Sn = (S - mean) / np.sqrt(var + LN_EPS) * gamma[None] + beta[None]
    k = X @ Wk
    v = X @ Wv
    q = Sn @ Wq
    M = (1.0 / math.sqrt(d_hat)) * np.einsum("bne,bke->bnk", k, q)
    attn = 1.0 / (1.0 + np.exp(-M)) + eps
    W = attn / attn.sum(-1, keepdims=True)
    return np.einsum("bnk,bne->bke", W, v)


if __name__ == "__main__":
    # Small shapes consistent with the module: batch N=2, set size n=8,
    # input dim d=32, K=8 slots of width h=16, projection dim d_hat=32.
    N, n, d = 2, 8, 32
    K, h, d_hat = 8, 16, 32

    key = jax.random.PRNGKey(0)
    kx, ks, kk, kq, kv = jax.random.split(key, 5)

    X = jax.random.normal(kx, (N, n, d), dtype=jnp.float32)

    # Deterministic slots: self.S = torch.rand(1, K, h), broadcast over batch.
    S_param = jax.random.uniform(ks, (1, K, h), dtype=jnp.float32)

    # nn.Linear(in, out, bias=False) weights are (out, in); we pass W^T so the
    # kernel does x @ W^T via a plain (in, out) matmul.
    def linear_wT(k_, in_f, out_f):
        bound = 1.0 / math.sqrt(in_f)
        W = jax.random.uniform(k_, (out_f, in_f), dtype=jnp.float32,
                               minval=-bound, maxval=bound)
        return W.T  # (in, out)

    Wk = linear_wT(kk, d, d_hat)   # (d, d_hat)
    Wq = linear_wT(kq, h, d_hat)   # (h, d_hat)
    Wv = linear_wT(kv, d, d_hat)   # (d, d_hat)

    gamma = jnp.ones((1, h), dtype=jnp.float32)   # LayerNorm weight init
    beta = jnp.zeros((1, h), dtype=jnp.float32)   # LayerNorm bias init

    # TODO(synk): the 'Random' slots path (torch.normal sampling of S) must be sampled
    # outside the kernel; the Deterministic path is what is fused here.

    ref = reference_forward_np(np.asarray(X),
                               np.broadcast_to(np.asarray(S_param), (N, K, h)),
                               np.asarray(Wk), np.asarray(Wq), np.asarray(Wv),
                               np.asarray(gamma), np.asarray(beta), d_hat)

    # f32 path: exact slot-axis divide (no approx reciprocal) -> tight agreement.
    out = slot_set_encoder_forward(X, S_param, Wk, Wq, Wv, gamma, beta, d_hat)
    out = jax.block_until_ready(out)
    np.testing.assert_allclose(np.asarray(out), ref, rtol=1e-4, atol=1e-4)

    # bf16 MXU-operand path (DMA-halving optimization); f32 accumulation + f32
    # sigmoid/normalize, so only matmul-operand rounding shows up (~1e-3 level).
    out_bf16 = slot_set_encoder_forward(X, S_param, Wk, Wq, Wv, gamma, beta, d_hat,
                                        compute_dtype=jnp.bfloat16)
    out_bf16 = jax.block_until_ready(out_bf16)
    np.testing.assert_allclose(np.asarray(out_bf16), ref, rtol=5e-2, atol=5e-2)

    print("KERNEL_OK")
</pallas_src>

<mosaic_0001>
module attributes {stable_mosaic.version = 11 : i64} {
  func.func @kernel(%arg0: i32, %arg1: memref<2x8x32xf32, #tpu.memory_space<vmem>>, %arg2: memref<32x8xf32, #tpu.memory_space<vmem>>, %arg3: memref<32x32xf32, #tpu.memory_space<vmem>>, %arg4: memref<32x32xf32, #tpu.memory_space<vmem>>, %arg5: memref<16x32xf32, #tpu.memory_space<vmem>>) attributes {dimension_semantics = [#tpu.dimension_semantics<parallel>], iteration_bounds = array<i64: 1>, scalar_prefetch = 0 : i64, scratch_operands = 0 : i64, tpu.core_type = #tpu.core_type<tc>, window_params = [{transform_indices = @transform_0, window_bounds = array<i64: 2, 8, 32>}, {pipeline_mode = #tpu.pipeline_mode<synchronous>, transform_indices = @transform_1, window_bounds = array<i64: 32, 8>}, {pipeline_mode = #tpu.pipeline_mode<synchronous>, transform_indices = @transform_2, window_bounds = array<i64: 32, 32>}, {pipeline_mode = #tpu.pipeline_mode<synchronous>, transform_indices = @transform_3, window_bounds = array<i64: 32, 32>}, {transform_indices = @transform_4, window_bounds = array<i64: 16, 32>}]} {
    %c0 = arith.constant 0 : index
    %c0_0 = arith.constant 0 : index
    %c0_1 = arith.constant 0 : index
    %0 = vector.load %arg1[%c0, %c0_0, %c0_1] : memref<2x8x32xf32, #tpu.memory_space<vmem>>, vector<2x8x32xf32>
    %1 = vector.shape_cast %0 : vector<2x8x32xf32> to vector<16x32xf32>
    %c0_2 = arith.constant 0 : index
    %c0_3 = arith.constant 0 : index
    %2 = vector.load %arg3[%c0_2, %c0_3] : memref<32x32xf32, #tpu.memory_space<vmem>>, vector<32x32xf32>
    %cst = arith.constant dense<0.000000e+00> : vector<16x32xf32>
    %3 = tpu.matmul %1, %2, %cst {dimension_numbers = #tpu.dot_dimension_numbers<[1], [0], [0], [1], [0, 0, 1, 1], [], []>} : vector<16x32xf32>, vector<32x32xf32>, vector<16x32xf32> -> vector<16x32xf32>
    %c0_4 = arith.constant 0 : index
    %c0_5 = arith.constant 0 : index
    %4 = vector.load %arg2[%c0_4, %c0_5] : memref<32x8xf32, #tpu.memory_space<vmem>>, vector<32x8xf32>
    %cst_6 = arith.constant dense<0.000000e+00> : vector<16x8xf32>
    %5 = tpu.matmul %3, %4, %cst_6 {dimension_numbers = #tpu.dot_dimension_numbers<[1], [0], [0], [1], [0, 0, 1, 1], [], []>} : vector<16x32xf32>, vector<32x8xf32>, vector<16x8xf32> -> vector<16x8xf32>
    %6 = arith.negf %5 : vector<16x8xf32>
    %7 = math.exp %6 : vector<16x8xf32>
    %cst_7 = arith.constant 1.000000e+00 : f32
    %8 = vector.broadcast %cst_7 : f32 to vector<16x8xf32>
    %9 = arith.addf %8, %7 : vector<16x8xf32>
    %10 = arith.divf %8, %9 : vector<16x8xf32>
    %cst_8 = arith.constant 9.99999993E-9 : f32
    %11 = vector.broadcast %cst_8 : f32 to vector<16x8xf32>
    %12 = arith.addf %10, %11 : vector<16x8xf32>
    %cst_9 = arith.constant dense<0.000000e+00> : vector<16xf32>
    %13 = vector.multi_reduction <add>, %12, %cst_9 [1] : vector<16x8xf32> to vector<16xf32>
    %14 = vector.shape_cast %13 : vector<16xf32> to vector<16x1xf32>
    %15 = vector.broadcast %14 : vector<16x1xf32> to vector<16x8xf32>
    %16 = arith.divf %12, %15 : vector<16x8xf32>
    %17 = vector.shape_cast %16 : vector<16x8xf32> to vector<2x8x8xf32>
    %cst_10 = arith.constant dense<0.000000e+00> : vector<2x8x32xf32>
    %18 = tpu.matmul %17, %0, %cst_10 {dimension_numbers = #tpu.dot_dimension_numbers<[1], [1], [2], [2], [0, 0, 0, 2, 1, 2], [0], [0]>} : vector<2x8x8xf32>, vector<2x8x32xf32>, vector<2x8x32xf32> -> vector<2x8x32xf32>
    %19 = vector.shape_cast %18 : vector<2x8x32xf32> to vector<16x32xf32>
    %c0_11 = arith.constant 0 : index
    %c0_12 = arith.constant 0 : index
    %20 = vector.load %arg4[%c0_11, %c0_12] : memref<32x32xf32, #tpu.memory_space<vmem>>, vector<32x32xf32>
    %cst_13 = arith.constant dense<0.000000e+00> : vector<16x32xf32>
    %21 = tpu.matmul %19, %20, %cst_13 {dimension_numbers = #tpu.dot_dimension_numbers<[1], [0], [0], [1], [0, 0, 1, 1], [], []>} : vector<16x32xf32>, vector<32x32xf32>, vector<16x32xf32> -> vector<16x32xf32>
    %c0_14 = arith.constant 0 : index
    %c0_15 = arith.constant 0 : index
    %22 = vector.load %arg5[%c0_14, %c0_15] : memref<16x32xf32, #tpu.memory_space<vmem>>, vector<16x32xf32>
    tpu.vector_store %arg5[%c0_14, %c0_15], %21 {strides = array<i32>} : memref<16x32xf32, #tpu.memory_space<vmem>>, vector<16x32xf32>,
    return
  }
  func.func @transform_0(%arg0: i32) -> (i32, i32, i32) {
    %c0_i32 = arith.constant 0 : i32
    %c0_i32_0 = arith.constant 0 : i32
    %c0_i32_1 = arith.constant 0 : i32
    return %arg0, %c0_i32, %c0_i32_0 : i32, i32, i32
  }
  func.func @transform_1(%arg0: i32) -> (i32, i32) {
    %c0_i32 = arith.constant 0 : i32
    %c0_i32_0 = arith.constant 0 : i32
    %c0_i32_1 = arith.constant 0 : i32
    return %c0_i32, %c0_i32_0 : i32, i32
  }
  func.func @transform_2(%arg0: i32) -> (i32, i32) {
    %c0_i32 = arith.constant 0 : i32
    %c0_i32_0 = arith.constant 0 : i32
    %c0_i32_1 = arith.constant 0 : i32
    return %c0_i32, %c0_i32_0 : i32, i32
  }
  func.func @transform_3(%arg0: i32) -> (i32, i32) {
    %c0_i32 = arith.constant 0 : i32
    %c0_i32_0 = arith.constant 0 : i32
    %c0_i32_1 = arith.constant 0 : i32
    return %c0_i32, %c0_i32_0 : i32, i32
  }
  func.func @transform_4(%arg0: i32) -> (i32, i32) {
    %c0_i32 = arith.constant 0 : i32
    %c0_i32_0 = arith.constant 0 : i32
    return %arg0, %c0_i32 : i32, i32
  }
}

</mosaic_0001>

<llo_original>
// kernel: tpu_custom_call.1
$region0: #{tpu_custom_call.1}
  #allocation0 [shape = 'u32[]', space=smem, size = 0x4, offset = 0x4, fixed_abs, tag = 'smem constant byte address 0x4 - core index']
  #allocation1 [shape = 'u32[144,128]{1,0:T(1,128)}', space=vmem, size = 0x12000, scoped, tag = 'internal scratch']
  %s0 = inlined_call_operand.hbm [shape: f32[2,8,32], index: 0, kind: input, shape index: {}]
  %s1 = inlined_call_operand.hbm [shape: f32[32,8], index: 1, kind: input, shape index: {}]
  %s2 = inlined_call_operand.hbm [shape: f32[32,32], index: 2, kind: input, shape index: {}]
  %s3 = inlined_call_operand.hbm [shape: f32[32,32], index: 3, kind: input, shape index: {}]
  %s4 = inlined_call_operand.hbm [shape: f32[16,32], index: 4, kind: output, shape index: {}]
  %s5 = sld [smem:[#allocation0]]
  $region42: #{tpu_custom_call.1} parent=0
    _
  %s7 = ssub.s32 1, %s5
  %s8 = scalar_select 0, %s7, %s5
  $region1: #{tpu_custom_call.1} parent=0
    #allocation2 [shape = 'u8[8192]{0}', space=vmem, size = 0x2000, scoped, tag = 'input window, operand 0, single buffered']
    #allocation3 [shape = 's32[1]{0}', space=sflag, size = 0x4, scoped, tag = 'scoped memory for tpu_custom_call.1']
    #allocation4 [shape = 's32[1]{0}', space=sflag, size = 0x4, scoped, tag = 'scoped memory for tpu_custom_call.1']
    #allocation5 [shape = 'u8[16384]{0}', space=vmem, size = 0x4000, scoped, tag = 'input window, operand 1, single buffered']
    #allocation6 [shape = 's32[1]{0}', space=sflag, size = 0x4, scoped, tag = 'scoped memory for tpu_custom_call.1']
    #allocation7 [shape = 'u8[16384]{0}', space=vmem, size = 0x4000, scoped, tag = 'input window, operand 2, single buffered']
    #allocation8 [shape = 'u8[16384]{0}', space=vmem, size = 0x4000, scoped, tag = 'input window, operand 3, single buffered']
    #allocation9 [shape = 's32[1]{0}', space=sflag, size = 0x4, scoped, tag = 'scoped memory for tpu_custom_call.1']
    #allocation10 [shape = 'u8[8192]{0}', space=vmem, size = 0x2000, scoped, tag = 'output window, operand 0, single buffered']
    %9 = vsyncpa [#allocation3], 0
    %10 = vsyncpa [#allocation6], 0
    %11 = vsyncpa [#allocation9], 0
    %12 = vsyncpa [#allocation4], 0
    // Predicated region
    $region2: #{tpu_custom_call.1} parent=1 // pred_check
      _
    $region3: #{tpu_custom_call.1} parent=1 // pred_check_branch
      %14 = sbr.rel (0) target = $region5
    $region4: #{tpu_custom_call.1} parent=1 // pred_region
      %s16 = ssub.s32 256, 256
      %17 = vsyncadd [#allocation3], %s16
      %s18 = sshll.u32 [#allocation2], 4
      %s19 = int_to_ptr.vmem [resolvable:$true] %s18
      %24 = dma.hbm_to_vmem [thread:$0]  %s0, 256, %s19, [#allocation3], 128, 128, 8
    $region5: #{tpu_custom_call.1} parent=1 // pred_fallthru
      _
    // Predicated region
    $region6: #{tpu_custom_call.1} parent=1 // pred_check
      _
    $region7: #{tpu_custom_call.1} parent=1 // pred_check_branch
      %26 = sbr.rel (0) target = $region9
    $region8: #{tpu_custom_call.1} parent=1 // pred_region
      %s28 = ssub.s32 512, 512
      %29 = vsyncadd [#allocation6], %s28
      %s30 = sshll.u32 [#allocation5], 4
      %s31 = int_to_ptr.vmem [resolvable:$true] %s30
      %36 = dma.hbm_to_vmem [thread:$0]  %s1, 512, %s31, [#allocation6], 128, 128, 8
    $region9: #{tpu_custom_call.1} parent=1 // pred_fallthru
      _
    // Predicated region
    $region10: #{tpu_custom_call.1} parent=1 // pred_check
      _
    $region11: #{tpu_custom_call.1} parent=1 // pred_check_branch
      %38 = sbr.rel (0) target = $region13
    $region12: #{tpu_custom_call.1} parent=1 // pred_region
      %s40 = ssub.s32 512, 512
      %41 = vsyncadd [#allocation6], %s40
      %s42 = sshll.u32 [#allocation7], 4
      %s43 = int_to_ptr.vmem [resolvable:$true] %s42
      %48 = dma.hbm_to_vmem [thread:$0]  %s2, 512, %s43, [#allocation6], 128, 128, 8
    $region13: #{tpu_custom_call.1} parent=1 // pred_fallthru
      _
    // Predicated region
    $region14: #{tpu_custom_call.1} parent=1 // pred_check
      _
    $region15: #{tpu_custom_call.1} parent=1 // pred_check_branch
      %50 = sbr.rel (0) target = $region17
    $region16: #{tpu_custom_call.1} parent=1 // pred_region
      %s52 = ssub.s32 512, 512
      %53 = vsyncadd [#allocation9], %s52
      %s54 = sshll.u32 [#allocation8], 4
      %s55 = int_to_ptr.vmem [resolvable:$true] %s54
      %60 = dma.hbm_to_vmem [thread:$0]  %s3, 512, %s55, [#allocation9], 128, 128, 8
    $region17: #{tpu_custom_call.1} parent=1 // pred_fallthru
      _
    // Predicated region
    $region18: #{tpu_custom_call.1} parent=1 // pred_check
      _
    $region19: #{tpu_custom_call.1} parent=1 // pred_check_branch
      %62 = sbr.rel (0) target = $region21
    $region20: #{tpu_custom_call.1} parent=1 // pred_region
      %63 = dma.done [#allocation3], 256
    $region21: #{tpu_custom_call.1} parent=1 // pred_fallthru
      _
    // Predicated region
    $region22: #{tpu_custom_call.1} parent=1 // pred_check
      _
    $region23: #{tpu_custom_call.1} parent=1 // pred_check_branch
      %65 = sbr.rel (0) target = $region25
    $region24: #{tpu_custom_call.1} parent=1 // pred_region
      %66 = dma.done [#allocation6], 512
    $region25: #{tpu_custom_call.1} parent=1 // pred_fallthru
      _
    // Predicated region
    $region26: #{tpu_custom_call.1} parent=1 // pred_check
      _
    $region27: #{tpu_custom_call.1} parent=1 // pred_check_branch
      %68 = sbr.rel (0) target = $region29
    $region28: #{tpu_custom_call.1} parent=1 // pred_region
      %69 = dma.done [#allocation6], 512
    $region29: #{tpu_custom_call.1} parent=1 // pred_fallthru
      _
    // Predicated region
    $region30: #{tpu_custom_call.1} parent=1 // pred_check
      _
    $region31: #{tpu_custom_call.1} parent=1 // pred_check_branch
      %71 = sbr.rel (0) target = $region33
    $region32: #{tpu_custom_call.1} parent=1 // pred_region
      %72 = dma.done [#allocation9], 512
    $region33: #{tpu_custom_call.1} parent=1 // pred_fallthru
      _
    %v73 = vld [vmem:[#allocation2] sm:$0xff]
    %v74 = vld [vmem:[#allocation2 + $0x8] sm:$0xff]
    %v75 = vld [vmem:[#allocation7] sm:$0xff]
    %v76 = vld [vmem:[#allocation7 + $0x8] sm:$0xff]
    %v77 = vld [vmem:[#allocation7 + $0x10] sm:$0xff]
    %v78 = vld [vmem:[#allocation7 + $0x18] sm:$0xff]
    %vm79 = vcmask 261120
    %v81 = vsel %vm79, %v73, 0
    %v84 = vsel %vm79, %v74, 0
    %86 = vmatprep.subr.mxu0 0.0
    %87 = vmatpush1.msra.mxu0 %v75
    %88 = vmatprep.subr.mxu0 0.0
    %89 = vmatpush1.msra.mxu0 %v76
    %90 = vmatprep.subr.mxu0 0.0
    %91 = vmatpush1.msra.mxu0 %v77
    %92 = vmatprep.subr.mxu0 0.0
    %93 = vmatpush1.msra.mxu0 %v78
    %94 = vmatprep.subr.mxu0 0.0
    %95 = vmatpush1.msra.mxu0 0.0
    %96 = vmatprep.subr.mxu0 0.0
    %97 = vmatpush1.msra.mxu0 0.0
    %98 = vmatprep.subr.mxu0 0.0
    %99 = vmatpush1.msra.mxu0 0.0
    %100 = vmatprep.subr.mxu0 0.0
    %101 = vmatpush1.msra.mxu0 0.0
    %102 = vmatprep.subr.mxu0 0.0
    %103 = vmatpush1.msra.mxu0 0.0
    %104 = vmatprep.subr.mxu0 0.0
    %105 = vmatpush1.msra.mxu0 0.0
    %106 = vmatprep.subr.mxu0 0.0
    %107 = vmatpush1.msra.mxu0 0.0
    %108 = vmatprep.subr.mxu0 0.0
    %109 = vmatpush1.msra.mxu0 0.0
    %110 = vmatprep.subr.mxu0 0.0
    %111 = vmatpush1.msra.mxu0 0.0
    %112 = vmatprep.subr.mxu0 0.0
    %113 = vmatpush1.msra.mxu0 0.0
    %114 = vmatprep.subr.mxu0 0.0
    %115 = vmatpush1.msra.mxu0 0.0
    %116 = vmatprep.subr.mxu0 0.0
    %117 = vmatpush1.msra.mxu0 0.0
    %118 = vmatprep.subr.mxu0 0.0
    %119 = vmatpush1.msra.mxu0 0.0
    %120 = vmatprep.subr.mxu0 0.0
    %121 = vmatpush1.msra.mxu0 0.0
    %122 = vmatprep.subr.mxu0 0.0
    %123 = vmatpush1.msra.mxu0 0.0
    %124 = vmatprep.subr.mxu0 0.0
    %125 = vmatpush1.msra.mxu0 0.0
    %126 = vmatprep.subr.mxu0 0.0
    %127 = vmatpush1.msra.mxu0 0.0
    %128 = vmatprep.subr.mxu0 0.0
    %129 = vmatpush1.msra.mxu0 0.0
    %130 = vmatprep.subr.mxu0 0.0
    %131 = vmatpush1.msra.mxu0 0.0
    %132 = vmatprep.subr.mxu0 0.0
    %133 = vmatpush1.msra.mxu0 0.0
    %134 = vmatprep.subr.mxu0 0.0
    %135 = vmatpush1.msra.mxu0 0.0
    %136 = vmatprep.subr.mxu0 0.0
    %137 = vmatpush1.msra.mxu0 0.0
    %138 = vmatprep.subr.mxu0 0.0
    %139 = vmatpush1.msra.mxu0 0.0
    %140 = vmatprep.subr.mxu0 0.0
    %141 = vmatpush1.msra.mxu0 0.0
    %142 = vmatprep.subr.mxu0 0.0
    %143 = vmatpush1.msra.mxu0 0.0
    %144 = vmatprep.subr.mxu0 0.0
    %145 = vmatpush1.msra.mxu0 0.0
    %146 = vmatprep.subr.mxu0 0.0
    %147 = vmatpush1.msra.mxu0 0.0
    %148 = vmatprep.subr.mxu0 0.0
    %149 = vmatpush1.msra.mxu0 0.0
    %150 = vmatprep.mubr.f32.mxu0 0.0
    %151 = vmatmul.mubr.f32.gmra.mrb[0].mxu0 %v81
    %v152 = vpop.f32.mrb[0].mxu0
    %v153 = vadd.f32 0.0, %v152
    %v154 = vpop.f32.mrb[0].mxu0
    %155 = vmatprep.mubr.f32.mxu0 0.0
    %156 = vmatmul.mubr.f32.gmra.mrb[0].mxu0 %v84
    %v157 = vpop.f32.mrb[0].mxu0
    %v158 = vadd.f32 0.0, %v157
    %v159 = vpop.f32.mrb[0].mxu0
    %160 = vdwg.mxu0
    %v161 = vld [vmem:[#allocation5] sm:$0xff]
    %v162 = vld [vmem:[#allocation5 + $0x8] sm:$0xff]
    %v163 = vld [vmem:[#allocation5 + $0x10] sm:$0xff]
    %v164 = vld [vmem:[#allocation5 + $0x18] sm:$0xff]
    %v166 = vsel %vm79, %v153, 0
    %v169 = vsel %vm79, %v158, 0
    %171 = vmatprep.subr.mxu0 0.0
    %172 = vmatpush1.msra.mxu0 %v161
    %173 = vmatprep.subr.mxu0 0.0
    %174 = vmatpush1.msra.mxu0 %v162
    %175 = vmatprep.subr.mxu0 0.0
    %176 = vmatpush1.msra.mxu0 %v163
    %177 = vmatprep.subr.mxu0 0.0
    %178 = vmatpush1.msra.mxu0 %v164
    %179 = vmatprep.subr.mxu0 0.0
    %180 = vmatpush1.msra.mxu0 0.0
    %181 = vmatprep.subr.mxu0 0.0
    %182 = vmatpush1.msra.mxu0 0.0
    %183 = vmatprep.subr.mxu0 0.0
    %184 = vmatpush1.msra.mxu0 0.0
    %185 = vmatprep.subr.mxu0 0.0
    %186 = vmatpush1.msra.mxu0 0.0
    %187 = vmatprep.subr.mxu0 0.0
    %188 = vmatpush1.msra.mxu0 0.0
    %189 = vmatprep.subr.mxu0 0.0
    %190 = vmatpush1.msra.mxu0 0.0
    %191 = vmatprep.subr.mxu0 0.0
    %192 = vmatpush1.msra.mxu0 0.0
    %193 = vmatprep.subr.mxu0 0.0
    %194 = vmatpush1.msra.mxu0 0.0
    %195 = vmatprep.subr.mxu0 0.0
    %196 = vmatpush1.msra.mxu0 0.0
    %197 = vmatprep.subr.mxu0 0.0
    %198 = vmatpush1.msra.mxu0 0.0
    %199 = vmatprep.subr.mxu0 0.0
    %200 = vmatpush1.msra.mxu0 0.0
    %201 = vmatprep.subr.mxu0 0.0
    %202 = vmatpush1.msra.mxu0 0.0
    %203 = vmatprep.subr.mxu0 0.0
    %204 = vmatpush1.msra.mxu0 0.0
    %205 = vmatprep.subr.mxu0 0.0
    %206 = vmatpush1.msra.mxu0 0.0
    %207 = vmatprep.subr.mxu0 0.0
    %208 = vmatpush1.msra.mxu0 0.0
    %209 = vmatprep.subr.mxu0 0.0
    %210 = vmatpush1.msra.mxu0 0.0
    %211 = vmatprep.subr.mxu0 0.0
    %212 = vmatpush1.msra.mxu0 0.0
    %213 = vmatprep.subr.mxu0 0.0
    %214 = vmatpush1.msra.mxu0 0.0
    %215 = vmatprep.subr.mxu0 0.0
    %216 = vmatpush1.msra.mxu0 0.0
    %217 = vmatprep.subr.mxu0 0.0
    %218 = vmatpush1.msra.mxu0 0.0
    %219 = vmatprep.subr.mxu0 0.0
    %220 = vmatpush1.msra.mxu0 0.0
    %221 = vmatprep.subr.mxu0 0.0
    %222 = vmatpush1.msra.mxu0 0.0
    %223 = vmatprep.subr.mxu0 0.0
    %224 = vmatpush1.msra.mxu0 0.0
    %225 = vmatprep.subr.mxu0 0.0
    %226 = vmatpush1.msra.mxu0 0.0
    %227 = vmatprep.subr.mxu0 0.0
    %228 = vmatpush1.msra.mxu0 0.0
    %229 = vmatprep.subr.mxu0 0.0
    %230 = vmatpush1.msra.mxu0 0.0
    %231 = vmatprep.subr.mxu0 0.0
    %232 = vmatpush1.msra.mxu0 0.0
    %233 = vmatprep.subr.mxu0 0.0
    %234 = vmatpush1.msra.mxu0 0.0
    %235 = vmatprep.mubr.f32.mxu0 0.0
    %236 = vmatmul.mubr.f32.gmra.mrb[0].mxu0 %v166
    %v237 = vpop.f32.mrb[0].mxu0
    %v238 = vadd.f32 0.0, %v237
    %v239 = vpop.f32.mrb[0].mxu0
    %240 = vmatprep.mubr.f32.mxu0 0.0
    %241 = vmatmul.mubr.f32.gmra.mrb[0].mxu0 %v169
    %v242 = vpop.f32.mrb[0].mxu0
    %v243 = vadd.f32 0.0, %v242
    %v244 = vpop.f32.mrb[0].mxu0
    %245 = vdwg.mxu0
    %v246 = vxor.u32 %v238, 2147483648
    %v247 = vxor.u32 %v243, 2147483648
    %v248 = vmul.f32 %v246, 1.442695
    %v249 = vpow.pop %v248
    %v250 = vmul.f32 %v247, 1.442695
    %v251 = vpow.pop %v250
    %v252 = vadd.f32 %v249, 1.0
    %v253 = vadd.f32 %v251, 1.0
    %v254 = vrcp.pop %v252
    %v255 = vmul.f32 1.0, %v254
    %v256 = vrcp.pop %v253
    %v257 = vmul.f32 1.0, %v256
    %v258 = vadd.f32 %v255, 1e-08
    %v259 = vadd.f32 %v257, 1e-08
    %vm260 = vcmask 64512
    %v261 = vsel %vm260, %v258, 0.0
    %262 = vadd.xlane.f32.xlu0 %v261
    %v263 = vpop.xlane.xlu0 %262
    %v264 = vsel %vm260, %v259, 0.0
    %265 = vadd.xlane.f32.xlu0 %v264
    %v266 = vpop.xlane.xlu0 %265
    %v267 = vrcp.pop %v263
    %v268 = vmul.f32 %v258, %v267
    %v269 = vrcp.pop %v266
    %v270 = vmul.f32 %v259, %v269
    %271 = vxpose.xlu0.b32.start [1/16] %v268, 128
    %272 = vxpose.xlu0.b32.cont [2/16] 0.0, 128
    %273 = vxpose.xlu0.b32.cont [3/16] 0.0, 128
    %274 = vxpose.xlu0.b32.cont [4/16] 0.0, 128
    %275 = vxpose.xlu0.b32.cont [5/16] 0.0, 128
    %276 = vxpose.xlu0.b32.cont [6/16] 0.0, 128
    %277 = vxpose.xlu0.b32.cont [7/16] 0.0, 128
    %278 = vxpose.xlu0.b32.cont [8/16] 0.0, 128
    %279 = vxpose.xlu0.b32.cont [9/16] 0.0, 128
    %280 = vxpose.xlu0.b32.cont [10/16] 0.0, 128
    %281 = vxpose.xlu0.b32.cont [11/16] 0.0, 128
    %282 = vxpose.xlu0.b32.cont [12/16] 0.0, 128
    %283 = vxpose.xlu0.b32.cont [13/16] 0.0, 128
    %284 = vxpose.xlu0.b32.cont [14/16] 0.0, 128
    %285 = vxpose.xlu0.b32.cont [15/16] 0.0, 128
    %286 = vxpose.xlu0.b32.end [16/16] 0.0, 128
    %v287 = vpop.trf.xlu0
    %v288 = vpop.trf.xlu0
    %v289 = vpop.trf.xlu0
    %v290 = vpop.trf.xlu0
    %v291 = vpop.trf.xlu0
    %v292 = vpop.trf.xlu0
    %v293 = vpop.trf.xlu0
    %v294 = vpop.trf.xlu0
    %v295 = vpop.trf.xlu0
    %v296 = vpop.trf.xlu0
    %v297 = vpop.trf.xlu0
    %v298 = vpop.trf.xlu0
    %v299 = vpop.trf.xlu0
    %v300 = vpop.trf.xlu0
    %v301 = vpop.trf.xlu0
    %v302 = vpop.trf.xlu0
    %v304 = vsel %vm260, %v287, 0
    %306 = vmatprep.subr.mxu0 0.0
    %307 = vmatpush1.msra.mxu0 %v73
    %308 = vmatprep.subr.mxu0 0.0
    %309 = vmatpush1.msra.mxu0 0.0
    %310 = vmatprep.subr.mxu0 0.0
    %311 = vmatpush1.msra.mxu0 0.0
    %312 = vmatprep.subr.mxu0 0.0
    %313 = vmatpush1.msra.mxu0 0.0
    %314 = vmatprep.subr.mxu0 0.0
    %315 = vmatpush1.msra.mxu0 0.0
    %316 = vmatprep.subr.mxu0 0.0
    %317 = vmatpush1.msra.mxu0 0.0
    %318 = vmatprep.subr.mxu0 0.0
    %319 = vmatpush1.msra.mxu0 0.0
    %320 = vmatprep.subr.mxu0 0.0
    %321 = vmatpush1.msra.mxu0 0.0
    %322 = vmatprep.subr.mxu0 0.0
    %323 = vmatpush1.msra.mxu0 0.0
    %324 = vmatprep.subr.mxu0 0.0
    %325 = vmatpush1.msra.mxu0 0.0
    %326 = vmatprep.subr.mxu0 0.0
    %327 = vmatpush1.msra.mxu0 0.0
    %328 = vmatprep.subr.mxu0 0.0
    %329 = vmatpush1.msra.mxu0 0.0
    %330 = vmatprep.subr.mxu0 0.0
    %331 = vmatpush1.msra.mxu0 0.0
    %332 = vmatprep.subr.mxu0 0.0
    %333 = vmatpush1.msra.mxu0 0.0
    %334 = vmatprep.subr.mxu0 0.0
    %335 = vmatpush1.msra.mxu0 0.0
    %336 = vmatprep.subr.mxu0 0.0
    %337 = vmatpush1.msra.mxu0 0.0
    %338 = vmatprep.subr.mxu0 0.0
    %339 = vmatpush1.msra.mxu0 0.0
    %340 = vmatprep.subr.mxu0 0.0
    %341 = vmatpush1.msra.mxu0 0.0
    %342 = vmatprep.subr.mxu0 0.0
    %343 = vmatpush1.msra.mxu0 0.0
    %344 = vmatprep.subr.mxu0 0.0
    %345 = vmatpush1.msra.mxu0 0.0
    %346 = vmatprep.subr.mxu0 0.0
    %347 = vmatpush1.msra.mxu0 0.0
    %348 = vmatprep.subr.mxu0 0.0
    %349 = vmatpush1.msra.mxu0 0.0
    %350 = vmatprep.subr.mxu0 0.0
    %351 = vmatpush1.msra.mxu0 0.0
    %352 = vmatprep.subr.mxu0 0.0
    %353 = vmatpush1.msra.mxu0 0.0
    %354 = vmatprep.subr.mxu0 0.0
    %355 = vmatpush1.msra.mxu0 0.0
    %356 = vmatprep.subr.mxu0 0.0
    %357 = vmatpush1.msra.mxu0 0.0
    %358 = vmatprep.subr.mxu0 0.0
    %359 = vmatpush1.msra.mxu0 0.0
    %360 = vmatprep.subr.mxu0 0.0
    %361 = vmatpush1.msra.mxu0 0.0
    %362 = vmatprep.subr.mxu0 0.0
    %363 = vmatpush1.msra.mxu0 0.0
    %364 = vmatprep.subr.mxu0 0.0
    %365 = vmatpush1.msra.mxu0 0.0
    %366 = vmatprep.subr.mxu0 0.0
    %367 = vmatpush1.msra.mxu0 0.0
    %368 = vmatprep.subr.mxu0 0.0
    %369 = vmatpush1.msra.mxu0 0.0
    %370 = vmatprep.mubr.f32.mxu0 0.0
    %371 = vmatmul.mubr.f32.gmra.mrb[0].mxu0 %v304
    %v372 = vpop.f32.mrb[0].mxu0
    %v373 = vadd.f32 0.0, %v372
    %v374 = vpop.f32.mrb[0].mxu0
    %375 = vdwg.mxu0
    %376 = vxpose.xlu0.b32.start [1/16] %v270, 128
    %377 = vxpose.xlu0.b32.cont [2/16] 0.0, 128
    %378 = vxpose.xlu0.b32.cont [3/16] 0.0, 128
    %379 = vxpose.xlu0.b32.cont [4/16] 0.0, 128
    %380 = vxpose.xlu0.b32.cont [5/16] 0.0, 128
    %381 = vxpose.xlu0.b32.cont [6/16] 0.0, 128
    %382 = vxpose.xlu0.b32.cont [7/16] 0.0, 128
    %383 = vxpose.xlu0.b32.cont [8/16] 0.0, 128
    %384 = vxpose.xlu0.b32.cont [9/16] 0.0, 128
    %385 = vxpose.xlu0.b32.cont [10/16] 0.0, 128
    %386 = vxpose.xlu0.b32.cont [11/16] 0.0, 128
    %387 = vxpose.xlu0.b32.cont [12/16] 0.0, 128
    %388 = vxpose.xlu0.b32.cont [13/16] 0.0, 128
    %389 = vxpose.xlu0.b32.cont [14/16] 0.0, 128
    %390 = vxpose.xlu0.b32.cont [15/16] 0.0, 128
    %391 = vxpose.xlu0.b32.end [16/16] 0.0, 128
    %v392 = vpop.trf.xlu0
    %v393 = vpop.trf.xlu0
    %v394 = vpop.trf.xlu0
    %v395 = vpop.trf.xlu0
    %v396 = vpop.trf.xlu0
    %v397 = vpop.trf.xlu0
    %v398 = vpop.trf.xlu0
    %v399 = vpop.trf.xlu0
    %v400 = vpop.trf.xlu0
    %v401 = vpop.trf.xlu0
    %v402 = vpop.trf.xlu0
    %v403 = vpop.trf.xlu0
    %v404 = vpop.trf.xlu0
    %v405 = vpop.trf.xlu0
    %v406 = vpop.trf.xlu0
    %v407 = vpop.trf.xlu0
    %v409 = vsel %vm260, %v392, 0
    %411 = vmatprep.subr.mxu0 0.0
    %412 = vmatpush1.msra.mxu0 %v74
    %413 = vmatprep.subr.mxu0 0.0
    %414 = vmatpush1.msra.mxu0 0.0
    %415 = vmatprep.subr.mxu0 0.0
    %416 = vmatpush1.msra.mxu0 0.0
    %417 = vmatprep.subr.mxu0 0.0
    %418 = vmatpush1.msra.mxu0 0.0
    %419 = vmatprep.subr.mxu0 0.0
    %420 = vmatpush1.msra.mxu0 0.0
    %421 = vmatprep.subr.mxu0 0.0
    %422 = vmatpush1.msra.mxu0 0.0
    %423 = vmatprep.subr.mxu0 0.0
    %424 = vmatpush1.msra.mxu0 0.0
    %425 = vmatprep.subr.mxu0 0.0
    %426 = vmatpush1.msra.mxu0 0.0
    %427 = vmatprep.subr.mxu0 0.0
    %428 = vmatpush1.msra.mxu0 0.0
    %429 = vmatprep.subr.mxu0 0.0
    %430 = vmatpush1.msra.mxu0 0.0
    %431 = vmatprep.subr.mxu0 0.0
    %432 = vmatpush1.msra.mxu0 0.0
    %433 = vmatprep.subr.mxu0 0.0
    %434 = vmatpush1.msra.mxu0 0.0
    %435 = vmatprep.subr.mxu0 0.0
    %436 = vmatpush1.msra.mxu0 0.0
    %437 = vmatprep.subr.mxu0 0.0
    %438 = vmatpush1.msra.mxu0 0.0
    %439 = vmatprep.subr.mxu0 0.0
    %440 = vmatpush1.msra.mxu0 0.0
    %441 = vmatprep.subr.mxu0 0.0
    %442 = vmatpush1.msra.mxu0 0.0
    %443 = vmatprep.subr.mxu0 0.0
    %444 = vmatpush1.msra.mxu0 0.0
    %445 = vmatprep.subr.mxu0 0.0
    %446 = vmatpush1.msra.mxu0 0.0
    %447 = vmatprep.subr.mxu0 0.0
    %448 = vmatpush1.msra.mxu0 0.0
    %449 = vmatprep.subr.mxu0 0.0
    %450 = vmatpush1.msra.mxu0 0.0
    %451 = vmatprep.subr.mxu0 0.0
    %452 = vmatpush1.msra.mxu0 0.0
    %453 = vmatprep.subr.mxu0 0.0
    %454 = vmatpush1.msra.mxu0 0.0
    %455 = vmatprep.subr.mxu0 0.0
    %456 = vmatpush1.msra.mxu0 0.0
    %457 = vmatprep.subr.mxu0 0.0
    %458 = vmatpush1.msra.mxu0 0.0
    %459 = vmatprep.subr.mxu0 0.0
    %460 = vmatpush1.msra.mxu0 0.0
    %461 = vmatprep.subr.mxu0 0.0
    %462 = vmatpush1.msra.mxu0 0.0
    %463 = vmatprep.subr.mxu0 0.0
    %464 = vmatpush1.msra.mxu0 0.0
    %465 = vmatprep.subr.mxu0 0.0
    %466 = vmatpush1.msra.mxu0 0.0
    %467 = vmatprep.subr.mxu0 0.0
    %468 = vmatpush1.msra.mxu0 0.0
    %469 = vmatprep.subr.mxu0 0.0
    %470 = vmatpush1.msra.mxu0 0.0
    %471 = vmatprep.subr.mxu0 0.0
    %472 = vmatpush1.msra.mxu0 0.0
    %473 = vmatprep.subr.mxu0 0.0
    %474 = vmatpush1.msra.mxu0 0.0
    %475 = vmatprep.mubr.f32.mxu0 0.0
    %476 = vmatmul.mubr.f32.gmra.mrb[0].mxu0 %v409
    %v477 = vpop.f32.mrb[0].mxu0
    %v478 = vadd.f32 0.0, %v477
    %v479 = vpop.f32.mrb[0].mxu0
    %480 = vdwg.mxu0
    %v481 = vld [vmem:[#allocation8] sm:$0xff]
    %v482 = vld [vmem:[#allocation8 + $0x8] sm:$0xff]
    %v483 = vld [vmem:[#allocation8 + $0x10] sm:$0xff]
    %v484 = vld [vmem:[#allocation8 + $0x18] sm:$0xff]
    %v486 = vsel %vm79, %v373, 0
    %v489 = vsel %vm79, %v478, 0
    %491 = vmatprep.subr.mxu0 0.0
    %492 = vmatpush1.msra.mxu0 %v481
    %493 = vmatprep.subr.mxu0 0.0
    %494 = vmatpush1.msra.mxu0 %v482
    %495 = vmatprep.subr.mxu0 0.0
    %496 = vmatpush1.msra.mxu0 %v483
    %497 = vmatprep.subr.mxu0 0.0
    %498 = vmatpush1.msra.mxu0 %v484
    %499 = vmatprep.subr.mxu0 0.0
    %500 = vmatpush1.msra.mxu0 0.0
    %501 = vmatprep.subr.mxu0 0.0
    %502 = vmatpush1.msra.mxu0 0.0
    %503 = vmatprep.subr.mxu0 0.0
    %504 = vmatpush1.msra.mxu0 0.0
    %505 = vmatprep.subr.mxu0 0.0
    %506 = vmatpush1.msra.mxu0 0.0
    %507 = vmatprep.subr.mxu0 0.0
    %508 = vmatpush1.msra.mxu0 0.0
    %509 = vmatprep.subr.mxu0 0.0
    %510 = vmatpush1.msra.mxu0 0.0
    %511 = vmatprep.subr.mxu0 0.0
    %512 = vmatpush1.msra.mxu0 0.0
    %513 = vmatprep.subr.mxu0 0.0
    %514 = vmatpush1.msra.mxu0 0.0
    %515 = vmatprep.subr.mxu0 0.0
    %516 = vmatpush1.msra.mxu0 0.0
    %517 = vmatprep.subr.mxu0 0.0
    %518 = vmatpush1.msra.mxu0 0.0
    %519 = vmatprep.subr.mxu0 0.0
    %520 = vmatpush1.msra.mxu0 0.0
    %521 = vmatprep.subr.mxu0 0.0
    %522 = vmatpush1.msra.mxu0 0.0
    %523 = vmatprep.subr.mxu0 0.0
    %524 = vmatpush1.msra.mxu0 0.0
    %525 = vmatprep.subr.mxu0 0.0
    %526 = vmatpush1.msra.mxu0 0.0
    %527 = vmatprep.subr.mxu0 0.0
    %528 = vmatpush1.msra.mxu0 0.0
    %529 = vmatprep.subr.mxu0 0.0
    %530 = vmatpush1.msra.mxu0 0.0
    %531 = vmatprep.subr.mxu0 0.0
    %532 = vmatpush1.msra.mxu0 0.0
    %533 = vmatprep.subr.mxu0 0.0
    %534 = vmatpush1.msra.mxu0 0.0
    %535 = vmatprep.subr.mxu0 0.0
    %536 = vmatpush1.msra.mxu0 0.0
    %537 = vmatprep.subr.mxu0 0.0
    %538 = vmatpush1.msra.mxu0 0.0
    %539 = vmatprep.subr.mxu0 0.0
    %540 = vmatpush1.msra.mxu0 0.0
    %541 = vmatprep.subr.mxu0 0.0
    %542 = vmatpush1.msra.mxu0 0.0
    %543 = vmatprep.subr.mxu0 0.0
    %544 = vmatpush1.msra.mxu0 0.0
    %545 = vmatprep.subr.mxu0 0.0
    %546 = vmatpush1.msra.mxu0 0.0
    %547 = vmatprep.subr.mxu0 0.0
    %548 = vmatpush1.msra.mxu0 0.0
    %549 = vmatprep.subr.mxu0 0.0
    %550 = vmatpush1.msra.mxu0 0.0
    %551 = vmatprep.subr.mxu0 0.0
    %552 = vmatpush1.msra.mxu0 0.0
    %553 = vmatprep.subr.mxu0 0.0
    %554 = vmatpush1.msra.mxu0 0.0
    %555 = vmatprep.mubr.f32.mxu0 0.0
    %556 = vmatmul.mubr.f32.gmra.mrb[0].mxu0 %v486
    %v557 = vpop.f32.mrb[0].mxu0
    %v558 = vadd.f32 0.0, %v557
    %v559 = vpop.f32.mrb[0].mxu0
    %560 = vmatprep.mubr.f32.mxu0 0.0
    %561 = vmatmul.mubr.f32.gmra.mrb[0].mxu0 %v489
    %v562 = vpop.f32.mrb[0].mxu0
    %v563 = vadd.f32 0.0, %v562
    %v564 = vpop.f32.mrb[0].mxu0
    %565 = vdwg.mxu0
    %566 = vst.msk [vmem:[#allocation10] sm:$0xff] %vm79, %v558
    %567 = vst.msk [vmem:[#allocation10 + $0x8] sm:$0xff] %vm79, %v563
    // Predicated region
    $region34: #{tpu_custom_call.1} parent=1 // pred_check
      _
    $region35: #{tpu_custom_call.1} parent=1 // pred_check_branch
      %569 = sbr.rel (0) target = $region37
    $region36: #{tpu_custom_call.1} parent=1 // pred_region
      %s571 = ssub.s32 256, 256
      %572 = vsyncadd [#allocation4], %s571
      %s573 = sshll.u32 [#allocation10], 4
      %s574 = int_to_ptr.vmem [resolvable:$true] %s573
      %579 = dma.vmem_to_hbm [thread:$0]  %s574, 256, %s4, [#allocation4], 128, 128, 8
    $region37: #{tpu_custom_call.1} parent=1 // pred_fallthru
      _
    // Predicated region
    $region38: #{tpu_custom_call.1} parent=1 // pred_check
      _
    $region39: #{tpu_custom_call.1} parent=1 // pred_check_branch
      %581 = sbr.rel (0) target = $region41
    $region40: #{tpu_custom_call.1} parent=1 // pred_region
      %582 = dma.done [#allocation4], 256
    $region41: #{tpu_custom_call.1} parent=1 // pred_fallthru
      _
    %583 = vsyncpa [#allocation3], 1
    %584 = vsyncpa [#allocation6], 1
    %585 = vsyncpa [#allocation9], 1
    %586 = vsyncpa [#allocation4], 1

</llo_original>
